<compile_context>
chip_gen: v7x
topology: tpu7x:2x2x1
jax: 0.10.0
libtpu: 0.0.40
codegen_flags: <defaults>
</compile_context>

<pallas_src>
import jax
import jax.numpy as jnp
from jax import lax
from jax.experimental import pallas as pl
from jax.experimental.pallas import tpu as pltpu


def _min_value(dtype):
    if jnp.issubdtype(dtype, jnp.floating):
        return float("-inf")
    return int(jnp.iinfo(dtype).min)


def _make_kernel(L, TL, dtype, mask_l):
    min_val = _min_value(dtype)

    def kernel(x_ref, o_ref, acc_ref):
        l = pl.program_id(1)

        @pl.when(l == 0)
        def _():
            acc_ref[...] = jnp.full(acc_ref.shape, min_val, acc_ref.dtype)

        chunk = x_ref[...]
        if mask_l:
            # Last L block may read unspecified out-of-bounds data; mask to -inf.
            col = l * TL + lax.broadcasted_iota(jnp.int32, chunk.shape, 1)
            chunk = jnp.where(col < L, chunk, min_val)

        # Elementwise running max on the VPU (cheap; defers the XLU lane reduce).
        acc_ref[...] = jnp.maximum(acc_ref[...], chunk)

        @pl.when(l == pl.num_programs(1) - 1)
        def _():
            # Single cross-lane reduce per output tile, one writeback per row tile.
            o_ref[...] = jnp.max(acc_ref[...], axis=-1, keepdims=True).astype(o_ref.dtype)

    return kernel


def global_max_pool1d(x, *, tm=512, tl=2048):
    """x: (N, C, L) -> (N, C, 1), max over last axis (== torch.max_pool1d(x, L))."""
    N, C, L = x.shape
    R = N * C
    xf = x.reshape(R, L)

    # (8,128)-aligned tiles when tiling an axis; full extent for small axes.
    TM = tm if R > tm else R          # tm is a multiple of 8
    TL = tl if L > tl else L          # tl is a multiple of 128
    mask_l = (L % TL) != 0            # only mask when the last L block is partial

    grid = (pl.cdiv(R, TM), pl.cdiv(L, TL))
    itemsize = xf.dtype.itemsize

    out = pl.pallas_call(
        _make_kernel(L, TL, xf.dtype, mask_l),
        out_shape=jax.ShapeDtypeStruct((R, 1), x.dtype),
        grid_spec=pltpu.PrefetchScalarGridSpec(
            num_scalar_prefetch=0,
            grid=grid,
            in_specs=[pl.BlockSpec((TM, TL), lambda r, l: (r, l))],
            # Same output block for every l -> resident accumulator output tile.
            out_specs=pl.BlockSpec((TM, 1), lambda r, l: (r, 0)),
            scratch_shapes=[pltpu.VMEM((TM, TL), xf.dtype)],
        ),
        compiler_params=pltpu.CompilerParams(
            dimension_semantics=("parallel", "arbitrary"),
            vmem_limit_bytes=48 * 1024 * 1024,
        ),
        cost_estimate=pl.CostEstimate(
            flops=R * L,
            transcendentals=0,
            bytes_accessed=R * L * itemsize + R * itemsize,
        ),
    )(xf)

    return out.reshape(N, C, 1)


if __name__ == "__main__":
    key = jax.random.PRNGKey(0)
    # Small shapes consistent with a 1-D conv feature map: (batch=2, channels=4, length=16)
    x = jax.random.normal(key, (2, 4, 16), dtype=jnp.float32)

    out = global_max_pool1d(x)
    out = jax.block_until_ready(out)

    ref = jnp.max(x, axis=-1, keepdims=True)
    assert out.shape == (2, 4, 1), out.shape
    assert jnp.allclose(out, ref), "mismatch vs reference"

    print("KERNEL_OK")
</pallas_src>

<mosaic_0001>
module attributes {stable_mosaic.version = 11 : i64} {
  func.func @kernel(%arg0: i32, %arg1: i32, %arg2: memref<8x16xf32, #tpu.memory_space<vmem>>, %arg3: memref<8x1xf32, #tpu.memory_space<vmem>>, %arg4: memref<8x16xf32, #tpu.memory_space<vmem>>) attributes {dimension_semantics = [#tpu.dimension_semantics<parallel>, #tpu.dimension_semantics<arbitrary>], iteration_bounds = array<i64: 1, 1>, scalar_prefetch = 0 : i64, scratch_operands = 1 : i64, tpu.core_type = #tpu.core_type<tc>, window_params = [{transform_indices = @transform_0, window_bounds = array<i64: 8, 16>}, {transform_indices = @transform_1, window_bounds = array<i64: 8, 1>}]} {
    %c0_i32 = arith.constant 0 : i32
    %0 = arith.cmpi eq, %arg1, %c0_i32 : i32
    %1 = arith.extui %0 : i1 to i32
    %c0_i32_0 = arith.constant 0 : i32
    %2 = arith.cmpi ne, %1, %c0_i32_0 : i32
    scf.if %2 {
      %cst = arith.constant 0xFF800000 : f32
      %10 = vector.broadcast %cst : f32 to vector<8x16xf32>
      %c0_8 = arith.constant 0 : index
      %c0_9 = arith.constant 0 : index
      %11 = vector.load %arg4[%c0_8, %c0_9] : memref<8x16xf32, #tpu.memory_space<vmem>>, vector<8x16xf32>
      tpu.vector_store %arg4[%c0_8, %c0_9], %10 {strides = array<i32>} : memref<8x16xf32, #tpu.memory_space<vmem>>, vector<8x16xf32>,
    } else {
    }
    %c0 = arith.constant 0 : index
    %c0_1 = arith.constant 0 : index
    %3 = vector.load %arg2[%c0, %c0_1] : memref<8x16xf32, #tpu.memory_space<vmem>>, vector<8x16xf32>
    %c0_2 = arith.constant 0 : index
    %c0_3 = arith.constant 0 : index
    %4 = vector.load %arg4[%c0_2, %c0_3] : memref<8x16xf32, #tpu.memory_space<vmem>>, vector<8x16xf32>
    %5 = arith.maximumf %4, %3 : vector<8x16xf32>
    %c0_4 = arith.constant 0 : index
    %c0_5 = arith.constant 0 : index
    %6 = vector.load %arg4[%c0_4, %c0_5] : memref<8x16xf32, #tpu.memory_space<vmem>>, vector<8x16xf32>
    tpu.vector_store %arg4[%c0_4, %c0_5], %5 {strides = array<i32>} : memref<8x16xf32, #tpu.memory_space<vmem>>, vector<8x16xf32>,
    %c0_i32_6 = arith.constant 0 : i32
    %7 = arith.cmpi eq, %arg1, %c0_i32_6 : i32
    %8 = arith.extui %7 : i1 to i32
    %c0_i32_7 = arith.constant 0 : i32
    %9 = arith.cmpi ne, %8, %c0_i32_7 : i32
    scf.if %9 {
      %c0_8 = arith.constant 0 : index
      %c0_9 = arith.constant 0 : index
      %10 = vector.load %arg4[%c0_8, %c0_9] : memref<8x16xf32, #tpu.memory_space<vmem>>, vector<8x16xf32>
      %cst = arith.constant dense<0xFF800000> : vector<8xf32>
      %11 = vector.multi_reduction <maximumf>, %10, %cst [1] : vector<8x16xf32> to vector<8xf32>
      %12 = vector.shape_cast %11 : vector<8xf32> to vector<8x1xf32>
      %c0_10 = arith.constant 0 : index
      %c0_11 = arith.constant 0 : index
      %13 = vector.load %arg3[%c0_10, %c0_11] : memref<8x1xf32, #tpu.memory_space<vmem>>, vector<8x1xf32>
      tpu.vector_store %arg3[%c0_10, %c0_11], %12 {strides = array<i32>} : memref<8x1xf32, #tpu.memory_space<vmem>>, vector<8x1xf32>,
    } else {
    }
    return
  }
  func.func @transform_0(%arg0: i32, %arg1: i32) -> (i32, i32) {
    %c0_i32 = arith.constant 0 : i32
    return %arg0, %arg1 : i32, i32
  }
  func.func @transform_1(%arg0: i32, %arg1: i32) -> (i32, i32) {
    %c0_i32 = arith.constant 0 : i32
    %c0_i32_0 = arith.constant 0 : i32
    return %arg0, %c0_i32 : i32, i32
  }
}

</mosaic_0001>

<llo_original>
// kernel: tpu_custom_call.1
$region0: #{tpu_custom_call.1}
  #allocation0 [shape = 'u32[]', space=smem, size = 0x4, offset = 0x4, fixed_abs, tag = 'smem constant byte address 0x4 - core index']
  #allocation1 [shape = 'u32[144,128]{1,0:T(1,128)}', space=vmem, size = 0x12000, scoped, tag = 'internal scratch']
  #allocation2 [shape = 'f32[8,16]{1,0:T(8,128)}', space=vmem, size = 0x1000, scoped, tag = 'scratch operand']
  %s0 = inlined_call_operand.hbm [shape: f32[8,16], index: 0, kind: input, shape index: {}]
  %s1 = inlined_call_operand.vmem [shape: f32[8,1], index: 1, kind: output, shape index: {}]
  %s2 = sld [smem:[#allocation0]]
  $region26: #{tpu_custom_call.1} parent=0
    _
  %s4 = ssub.s32 1, %s2
  %s5 = scalar_select 0, %s4, %s2
  $region1: #{tpu_custom_call.1} parent=0
    #allocation3 [shape = 'u8[4096]{0}', space=vmem, size = 0x1000, scoped, tag = 'input window, operand 0, single buffered']
    #allocation4 [shape = 's32[1]{0}', space=sflag, size = 0x4, scoped, tag = 'scoped memory for tpu_custom_call.1']
    %6 = vsyncpa [#allocation4], 0
    // Predicated region
    $region2: #{tpu_custom_call.1} parent=1 // pred_check
      _
    $region3: #{tpu_custom_call.1} parent=1 // pred_check_branch
      %8 = sbr.rel (0) target = $region5
    $region4: #{tpu_custom_call.1} parent=1 // pred_region
      %s10 = ssub.s32 128, 128
      %11 = vsyncadd [#allocation4], %s10
      %s13 = sshll.u32 [#allocation3], 4
      %s14 = int_to_ptr.vmem [resolvable:$true] %s13
      %16 = dma.hbm_to_vmem [thread:$0]  %s0, 128, %s14, [#allocation4]
    $region5: #{tpu_custom_call.1} parent=1 // pred_fallthru
      _
    // Predicated region
    $region6: #{tpu_custom_call.1} parent=1 // pred_check
      _
    $region7: #{tpu_custom_call.1} parent=1 // pred_check_branch
      %18 = sbr.rel (0) target = $region9
    $region8: #{tpu_custom_call.1} parent=1 // pred_region
      %19 = dma.done [#allocation4], 128
    $region9: #{tpu_custom_call.1} parent=1 // pred_fallthru
      _
    %p20 = scmp.eq.s32.totalorder 0, 0
    // Predicated region
    $region10: #{tpu_custom_call.1} parent=1 // pred_check
      %p21 = pneg %p20
    $region11: #{tpu_custom_call.1} parent=1 // pred_check_branch
      %23 = sbr.rel (%p21) target = $region13
    $region12: #{tpu_custom_call.1} parent=1 // pred_region
      %vm24 = vcmask 130048
      %25 = vst.msk [vmem:[#allocation2] sm:$0xff] %vm24, -inf
    $region13: #{tpu_custom_call.1} parent=1 // pred_fallthru
      _
    %v26 = vld [vmem:[#allocation3] sm:$0xff]
    %v27 = vld [vmem:[#allocation2] sm:$0xff]
    %v28 = vmax.f32 %v27, %v26
    %vm29 = vcmask 130048
    %30 = vst.msk [vmem:[#allocation2] sm:$0xff] %vm29, %v28
    // Predicated region
    $region14: #{tpu_custom_call.1} parent=1 // pred_check
      %p31 = pneg %p20
    $region15: #{tpu_custom_call.1} parent=1 // pred_check_branch
      %33 = sbr.rel (%p31) target = $region17
    $region16: #{tpu_custom_call.1} parent=1 // pred_region
      %v34 = vld [vmem:[#allocation2] sm:$0xff]
      %v35 = vsel %vm29, %v34, -inf
      %36 = vmax.xlane.f32.xlu0 %v35
      %v37 = vpop.xlane.xlu0 %36
      %vm38 = vcmask 7168
      %39 = vst.msk [vmem:[%s1] sm:$0xff] %vm38, %v37
    $region17: #{tpu_custom_call.1} parent=1 // pred_fallthru
      _
    // Predicated region
    $region18: #{tpu_custom_call.1} parent=1 // pred_check
      _
    $region19: #{tpu_custom_call.1} parent=1 // pred_check_branch
      %41 = sbr.rel (0) target = $region21
    $region20: #{tpu_custom_call.1} parent=1 // pred_region
      _
    $region21: #{tpu_custom_call.1} parent=1 // pred_fallthru
      _
    // Predicated region
    $region22: #{tpu_custom_call.1} parent=1 // pred_check
      _
    $region23: #{tpu_custom_call.1} parent=1 // pred_check_branch
      %43 = sbr.rel (0) target = $region25
    $region24: #{tpu_custom_call.1} parent=1 // pred_region
      _
    $region25: #{tpu_custom_call.1} parent=1 // pred_fallthru
      _
    %44 = vsyncpa [#allocation4], 1

</llo_original>
